<compile_context>
chip_gen: v6e
topology: v6e:2x2x1
jax: 0.10.0
libtpu: 0.0.40
codegen_flags: <defaults>
</compile_context>

<pallas_src>
import jax
import jax.numpy as jnp
from jax.experimental import pallas as pl
from jax.experimental.pallas import tpu as pltpu

_EPS = 1e-8
_LANES = 128
_SUBLANES = 8


def _round_up(x: int, m: int) -> int:
    return ((x + m - 1) // m) * m


def _cdiv(a: int, b: int) -> int:
    return (a + b - 1) // b


def _loss_kernel(x_ref, y_ref, o_ref):
    """Accumulate [sum |‖x‖-‖y‖| , sum cos(x,y)] for one (TM, Dp) row tile."""
    t = pl.program_id(1)  # reduction ("arbitrary") axis

    x = x_ref[...].astype(jnp.float32)  # (TM, Dp)
    y = y_ref[...].astype(jnp.float32)

    # Row-wise reductions along the lane (feature) axis.
    nx = jnp.sqrt(jnp.sum(x * x, axis=1, keepdims=True))  # (TM, 1)
    ny = jnp.sqrt(jnp.sum(y * y, axis=1, keepdims=True))  # (TM, 1)
    dot = jnp.sum(x * y, axis=1, keepdims=True)            # (TM, 1)

    length_part = jnp.sum(jnp.abs(nx - ny))

    # PyTorch CosineSimilarity eps semantics: clamp each norm separately.
    denom = jnp.maximum(nx, _EPS) * jnp.maximum(ny, _EPS)
    cos = dot * pl.reciprocal(denom, approx=True)           # EUP slot, not VALU
    cos_part = jnp.sum(cos)

    # Pack the two partial sums into lane 0 / lane 1 of the (1, 8, 128)
    # VMEM-resident output block (read back as [:, 0, 0] and [:, 0, 1]).
    lane = jax.lax.broadcasted_iota(jnp.int32, o_ref.shape, 2)
    partial = jnp.where(lane == 0, length_part,
                        jnp.where(lane == 1, cos_part, 0.0))

    @pl.when(t == 0)
    def _init():
        o_ref[...] = jnp.zeros_like(o_ref)

    o_ref[...] += partial


def pallas_loss(x: jax.Array, y: jax.Array, *,
                target_tile_bytes: int = 2 << 20) -> jax.Array:
    assert x.shape == y.shape and x.ndim == 2
    n, d = x.shape
    x = x.astype(jnp.float32)
    y = y.astype(jnp.float32)

    # --- lane-dense feature axis: zero-pad D to a multiple of 128 ---
    dp = _round_up(d, _LANES)
    if dp != d:
        x = jnp.pad(x, ((0, 0), (0, dp - d)))
        y = jnp.pad(y, ((0, 0), (0, dp - d)))

    # --- row tile: biggest multiple of 8 within the per-buffer VMEM budget ---
    # (Pallas double-buffers: 2 inputs x 2 buffers x tile_bytes of VMEM.)
    tm_cap = max(_SUBLANES, (target_tile_bytes // (dp * 4)) // _SUBLANES * _SUBLANES)
    tm = min(tm_cap, _round_up(n, _SUBLANES))

    num_tiles = _cdiv(n, tm)
    # Leading "parallel" axis: shard row tiles across the 2 TensorCores on v7x
    # (degenerates to a single chunk when there is only one tile of work).
    num_chunks = 2 if num_tiles >= 2 else 1
    tiles_per_chunk = _cdiv(num_tiles, num_chunks)
    n_pad = num_chunks * tiles_per_chunk * tm
    if n_pad != n:
        # Zero rows contribute exactly 0 to both partial sums.
        x = jnp.pad(x, ((0, n_pad - n), (0, 0)))
        y = jnp.pad(y, ((0, n_pad - n), (0, 0)))

    def row_map(c, t):
        return (c * tiles_per_chunk + t, 0)

    partials = pl.pallas_call(
        _loss_kernel,
        out_shape=jax.ShapeDtypeStruct((num_chunks, _SUBLANES, _LANES), jnp.float32),
        grid_spec=pltpu.PrefetchScalarGridSpec(
            num_scalar_prefetch=0,
            grid=(num_chunks, tiles_per_chunk),
            in_specs=[
                pl.BlockSpec((tm, dp), row_map),
                pl.BlockSpec((tm, dp), row_map),
            ],
            # Same output block for every t -> VMEM-resident accumulator,
            # written back to HBM only once per chunk.
            out_specs=pl.BlockSpec((1, _SUBLANES, _LANES), lambda c, t: (c, 0, 0)),
        ),
        compiler_params=pltpu.CompilerParams(
            dimension_semantics=("parallel", "arbitrary"),
            vmem_limit_bytes=32 * 1024 * 1024,
        ),
    )(x, y)

    # Finalize with the TRUE row count (not the padded one).
    length_loss = jnp.sum(partials[:, 0, 0]) / n
    angle_loss = 1.0 - jnp.sum(partials[:, 0, 1]) / n
    return length_loss + 2.0 * angle_loss


def reference_loss(x, y):
    nx = jnp.linalg.norm(x, axis=1)
    ny = jnp.linalg.norm(y, axis=1)
    length_loss = jnp.mean(jnp.abs(nx - ny))
    # PyTorch CosineSimilarity clamps each norm separately with eps.
    cos = jnp.sum(x * y, axis=1) / (jnp.maximum(nx, _EPS) * jnp.maximum(ny, _EPS))
    angle_loss = 1.0 - jnp.mean(cos)
    return length_loss + 2.0 * angle_loss


if __name__ == "__main__":
    key = jax.random.PRNGKey(0)
    kx, ky = jax.random.split(key)

    # Small shape implied by the forward: (batch, feature), dim=1 reduced.
    # NOTE: at this size the call is pure launch overhead; the tiled /
    # megacore path only pays off for non-trivial N*D (also exercised below).
    N, D = 8, 32
    x = jax.random.normal(kx, (N, D), dtype=jnp.float32)
    y = jax.random.normal(ky, (N, D), dtype=jnp.float32)

    out = jax.block_until_ready(pallas_loss(x, y))
    ref = jax.block_until_ready(reference_loss(x, y))
    # Tolerance slightly relaxed for the approximate EUP reciprocal.
    assert jnp.allclose(out, ref, rtol=5e-3, atol=5e-3), (out, ref)

    # Exercise the multi-tile / dual-chunk / row+lane padded path as well.
    N2, D2 = 3000, 96
    x2 = jax.random.normal(kx, (N2, D2), dtype=jnp.float32)
    y2 = jax.random.normal(ky, (N2, D2), dtype=jnp.float32)
    out2 = jax.block_until_ready(pallas_loss(x2, y2, target_tile_bytes=128 * 1024))
    ref2 = jax.block_until_ready(reference_loss(x2, y2))
    assert jnp.allclose(out2, ref2, rtol=5e-3, atol=5e-3), (out2, ref2)

    print("KERNEL_OK")
</pallas_src>

<mosaic_0001>
module attributes {stable_mosaic.version = 11 : i64} {
  func.func @_loss_kernel(%arg0: i32, %arg1: i32, %arg2: memref<8x128xf32, #tpu.memory_space<vmem>>, %arg3: memref<8x128xf32, #tpu.memory_space<vmem>>, %arg4: memref<1x8x128xf32, #tpu.memory_space<vmem>>) attributes {dimension_semantics = [#tpu.dimension_semantics<parallel>, #tpu.dimension_semantics<arbitrary>], iteration_bounds = array<i64: 1, 1>, scalar_prefetch = 0 : i64, scratch_operands = 0 : i64, tpu.core_type = #tpu.core_type<tc>, window_params = [{transform_indices = @transform_0, window_bounds = array<i64: 8, 128>}, {transform_indices = @transform_1, window_bounds = array<i64: 8, 128>}, {transform_indices = @transform_2, window_bounds = array<i64: 1, 8, 128>}]} {
    %c0 = arith.constant 0 : index
    %c0_0 = arith.constant 0 : index
    %0 = vector.load %arg2[%c0, %c0_0] : memref<8x128xf32, #tpu.memory_space<vmem>>, vector<8x128xf32>
    %c0_1 = arith.constant 0 : index
    %c0_2 = arith.constant 0 : index
    %1 = vector.load %arg3[%c0_1, %c0_2] : memref<8x128xf32, #tpu.memory_space<vmem>>, vector<8x128xf32>
    %2 = arith.mulf %0, %0 : vector<8x128xf32>
    %cst = arith.constant dense<0.000000e+00> : vector<8xf32>
    %3 = vector.multi_reduction <add>, %2, %cst [1] : vector<8x128xf32> to vector<8xf32>
    %4 = vector.shape_cast %3 : vector<8xf32> to vector<8x1xf32>
    %5 = math.sqrt %4 : vector<8x1xf32>
    %6 = arith.mulf %1, %1 : vector<8x128xf32>
    %cst_3 = arith.constant dense<0.000000e+00> : vector<8xf32>
    %7 = vector.multi_reduction <add>, %6, %cst_3 [1] : vector<8x128xf32> to vector<8xf32>
    %8 = vector.shape_cast %7 : vector<8xf32> to vector<8x1xf32>
    %9 = math.sqrt %8 : vector<8x1xf32>
    %10 = arith.mulf %0, %1 : vector<8x128xf32>
    %cst_4 = arith.constant dense<0.000000e+00> : vector<8xf32>
    %11 = vector.multi_reduction <add>, %10, %cst_4 [1] : vector<8x128xf32> to vector<8xf32>
    %12 = vector.shape_cast %11 : vector<8xf32> to vector<8x1xf32>
    %13 = arith.subf %5, %9 : vector<8x1xf32>
    %14 = math.absf %13 : vector<8x1xf32>
    %15 = vector.shape_cast %14 : vector<8x1xf32> to vector<1x8x1xf32>
    %cst_5 = arith.constant dense<0.000000e+00> : vector<1xf32>
    %16 = vector.multi_reduction <add>, %15, %cst_5 [1, 2] : vector<1x8x1xf32> to vector<1xf32>
    %17 = vector.shape_cast %16 : vector<1xf32> to vector<1x1x1xf32>
    %18 = vector.extract %17[0, 0, 0] : f32 from vector<1x1x1xf32>
    %cst_6 = arith.constant 9.99999993E-9 : f32
    %19 = vector.broadcast %cst_6 : f32 to vector<8x1xf32>
    %20 = arith.maximumf %5, %19 : vector<8x1xf32>
    %cst_7 = arith.constant 9.99999993E-9 : f32
    %21 = vector.broadcast %cst_7 : f32 to vector<8x1xf32>
    %22 = arith.maximumf %9, %21 : vector<8x1xf32>
    %23 = arith.mulf %20, %22 : vector<8x1xf32>
    %24 = tpu.reciprocal %23 {approx = true} : vector<8x1xf32> -> vector<8x1xf32>
    %25 = arith.mulf %12, %24 : vector<8x1xf32>
    %26 = vector.shape_cast %25 : vector<8x1xf32> to vector<1x8x1xf32>
    %cst_8 = arith.constant dense<0.000000e+00> : vector<1xf32>
    %27 = vector.multi_reduction <add>, %26, %cst_8 [1, 2] : vector<1x8x1xf32> to vector<1xf32>
    %28 = vector.shape_cast %27 : vector<1xf32> to vector<1x1x1xf32>
    %29 = vector.extract %28[0, 0, 0] : f32 from vector<1x1x1xf32>
    %30 = tpu.iota {dimensions = array<i32: 2>} : vector<1x8x128xi32>
    %c0_i32 = arith.constant 0 : i32
    %31 = vector.broadcast %c0_i32 : i32 to vector<1x8x128xi32>
    %32 = arith.cmpi eq, %30, %31 : vector<1x8x128xi32>
    %c1_i32 = arith.constant 1 : i32
    %33 = vector.broadcast %c1_i32 : i32 to vector<1x8x128xi32>
    %34 = arith.cmpi eq, %30, %33 : vector<1x8x128xi32>
    %cst_9 = arith.constant 0.000000e+00 : f32
    %35 = vector.broadcast %29 : f32 to vector<1x8x128xf32>
    %36 = vector.broadcast %cst_9 : f32 to vector<1x8x128xf32>
    %37 = arith.select %34, %35, %36 : vector<1x8x128xi1>, vector<1x8x128xf32>
    %38 = vector.broadcast %18 : f32 to vector<1x8x128xf32>
    %39 = arith.select %32, %38, %37 : vector<1x8x128xi1>, vector<1x8x128xf32>
    %c0_i32_10 = arith.constant 0 : i32
    %40 = arith.cmpi eq, %arg1, %c0_i32_10 : i32
    %41 = arith.extui %40 : i1 to i32
    %c0_i32_11 = arith.constant 0 : i32
    %42 = arith.cmpi ne, %41, %c0_i32_11 : i32
    scf.if %42 {
      %cst_18 = arith.constant 0.000000e+00 : f32
      %46 = vector.broadcast %cst_18 : f32 to vector<1x8x128xf32>
      %c0_19 = arith.constant 0 : index
      %c0_20 = arith.constant 0 : index
      %c0_21 = arith.constant 0 : index
      %47 = vector.load %arg4[%c0_19, %c0_20, %c0_21] : memref<1x8x128xf32, #tpu.memory_space<vmem>>, vector<1x8x128xf32>
      tpu.vector_store %arg4[%c0_19, %c0_20, %c0_21], %46 {strides = array<i32>} : memref<1x8x128xf32, #tpu.memory_space<vmem>>, vector<1x8x128xf32>,
    } else {
    }
    %c0_12 = arith.constant 0 : index
    %c0_13 = arith.constant 0 : index
    %c0_14 = arith.constant 0 : index
    %43 = vector.load %arg4[%c0_12, %c0_13, %c0_14] : memref<1x8x128xf32, #tpu.memory_space<vmem>>, vector<1x8x128xf32>
    %44 = arith.addf %43, %39 : vector<1x8x128xf32>
    %c0_15 = arith.constant 0 : index
    %c0_16 = arith.constant 0 : index
    %c0_17 = arith.constant 0 : index
    %45 = vector.load %arg4[%c0_15, %c0_16, %c0_17] : memref<1x8x128xf32, #tpu.memory_space<vmem>>, vector<1x8x128xf32>
    tpu.vector_store %arg4[%c0_15, %c0_16, %c0_17], %44 {strides = array<i32>} : memref<1x8x128xf32, #tpu.memory_space<vmem>>, vector<1x8x128xf32>,
    return
  }
  func.func @transform_0(%arg0: i32, %arg1: i32) -> (i32, i32) {
    %c1_i32 = arith.constant 1 : i32
    %0 = arith.muli %arg0, %c1_i32 : i32
    %1 = arith.addi %0, %arg1 : i32
    %c0_i32 = arith.constant 0 : i32
    %c0_i32_0 = arith.constant 0 : i32
    return %1, %c0_i32 : i32, i32
  }
  func.func @transform_1(%arg0: i32, %arg1: i32) -> (i32, i32) {
    %c1_i32 = arith.constant 1 : i32
    %0 = arith.muli %arg0, %c1_i32 : i32
    %1 = arith.addi %0, %arg1 : i32
    %c0_i32 = arith.constant 0 : i32
    %c0_i32_0 = arith.constant 0 : i32
    return %1, %c0_i32 : i32, i32
  }
  func.func @transform_2(%arg0: i32, %arg1: i32) -> (i32, i32, i32) {
    %c0_i32 = arith.constant 0 : i32
    %c0_i32_0 = arith.constant 0 : i32
    %c0_i32_1 = arith.constant 0 : i32
    return %arg0, %c0_i32, %c0_i32_0 : i32, i32, i32
  }
}

</mosaic_0001>

<llo_original>
// kernel: tpu_custom_call.1
$region0: #{tpu_custom_call.1}
  #allocation0 [shape = 'u32[]', space=smem, size = 0x4, offset = 0x4, fixed_abs, tag = 'smem constant byte address 0x4 - core index']
  #allocation1 [shape = 'u32[144,128]{1,0:T(1,128)}', space=vmem, size = 0x12000, scoped, tag = 'internal scratch']
  %s0 = inlined_call_operand.hbm [shape: f32[8,128], index: 0, kind: input, shape index: {}]
  %s1 = inlined_call_operand.hbm [shape: f32[8,128], index: 1, kind: input, shape index: {}]
  %s2 = inlined_call_operand.hbm [shape: f32[1,8,128], index: 2, kind: output, shape index: {}]
  %s3 = sld [smem:[#allocation0]]
  $region30: #{tpu_custom_call.1} parent=0
    _
  %s5 = ssub.s32 1, %s3
  %s6 = scalar_select 0, %s5, %s3
  $region1: #{tpu_custom_call.1} parent=0
    #allocation2 [shape = 'u8[4096]{0}', space=vmem, size = 0x1000, scoped, tag = 'input window, operand 0, single buffered']
    #allocation3 [shape = 's32[1]{0}', space=sflag, size = 0x4, scoped, tag = 'scoped memory for tpu_custom_call.1']
    #allocation4 [shape = 's32[1]{0}', space=sflag, size = 0x4, scoped, tag = 'scoped memory for tpu_custom_call.1']
    #allocation5 [shape = 'u8[4096]{0}', space=vmem, size = 0x1000, scoped, tag = 'input window, operand 1, single buffered']
    #allocation6 [shape = 's32[1]{0}', space=sflag, size = 0x4, scoped, tag = 'scoped memory for tpu_custom_call.1']
    #allocation7 [shape = 'u8[4096]{0}', space=vmem, size = 0x1000, scoped, tag = 'output window, operand 0, single buffered']
    %7 = vsyncpa [#allocation3], 0
    %8 = vsyncpa [#allocation6], 0
    %9 = vsyncpa [#allocation4], 0
    // Predicated region
    $region2: #{tpu_custom_call.1} parent=1 // pred_check
      _
    $region3: #{tpu_custom_call.1} parent=1 // pred_check_branch
      %11 = sbr.rel (0) target = $region5
    $region4: #{tpu_custom_call.1} parent=1 // pred_region
      %s12 = sadd.s32 0, 0
      %s14 = ssub.s32 128, 128
      %15 = vsyncadd [#allocation3], %s14
      %s16 = smul.addr %s12, 128
      %s17 = scalar_lea.hbm %s0, %s16
      %s19 = sshll.u32 [#allocation2], 4
      %s20 = int_to_ptr.vmem [resolvable:$true] %s19
      %22 = dma.hbm_to_vmem [thread:$0]  %s17, 128, %s20, [#allocation3]
    $region5: #{tpu_custom_call.1} parent=1 // pred_fallthru
      _
    // Predicated region
    $region6: #{tpu_custom_call.1} parent=1 // pred_check
      _
    $region7: #{tpu_custom_call.1} parent=1 // pred_check_branch
      %24 = sbr.rel (0) target = $region9
    $region8: #{tpu_custom_call.1} parent=1 // pred_region
      %s25 = sadd.s32 0, 0
      %s27 = ssub.s32 128, 128
      %28 = vsyncadd [#allocation6], %s27
      %s29 = smul.addr %s25, 128
      %s30 = scalar_lea.hbm %s1, %s29
      %s32 = sshll.u32 [#allocation5], 4
      %s33 = int_to_ptr.vmem [resolvable:$true] %s32
      %35 = dma.hbm_to_vmem [thread:$0]  %s30, 128, %s33, [#allocation6]
    $region9: #{tpu_custom_call.1} parent=1 // pred_fallthru
      _
    // Predicated region
    $region10: #{tpu_custom_call.1} parent=1 // pred_check
      _
    $region11: #{tpu_custom_call.1} parent=1 // pred_check_branch
      %37 = sbr.rel (0) target = $region13
    $region12: #{tpu_custom_call.1} parent=1 // pred_region
      %38 = dma.done [#allocation3], 128
    $region13: #{tpu_custom_call.1} parent=1 // pred_fallthru
      _
    // Predicated region
    $region14: #{tpu_custom_call.1} parent=1 // pred_check
      _
    $region15: #{tpu_custom_call.1} parent=1 // pred_check_branch
      %40 = sbr.rel (0) target = $region17
    $region16: #{tpu_custom_call.1} parent=1 // pred_region
      %41 = dma.done [#allocation6], 128
    $region17: #{tpu_custom_call.1} parent=1 // pred_fallthru
      _
    %s42 = sadd.s32 0, 0
    %s43 = sadd.s32 0, 0
    %v44 = vld [vmem:[#allocation2] sm:$0xff]
    %v45 = vld [vmem:[#allocation5] sm:$0xff]
    %v46 = vmul.f32 %v44, %v44
    %47 = vadd.xlane.f32.xlu0 %v46
    %v48 = vpop.xlane.xlu0 %47
    %v49 = vrsqrt.pop %v48
    %v50 = vmul.f32 %v48, %v49
    %vm51 = vcmp.eq.f32.partialorder %v48, inf
    %v52 = vsel %vm51, %v48, %v50
    %vm53 = vcmp.eq.f32.partialorder %v48, 0.0
    %v54 = vand.u32 %v48, 2147483648
    %v55 = vsel %vm53, %v54, %v52
    %v56 = vmul.f32 %v45, %v45
    %57 = vadd.xlane.f32.xlu0 %v56
    %v58 = vpop.xlane.xlu0 %57
    %v59 = vrsqrt.pop %v58
    %v60 = vmul.f32 %v58, %v59
    %vm61 = vcmp.eq.f32.partialorder %v58, inf
    %v62 = vsel %vm61, %v58, %v60
    %vm63 = vcmp.eq.f32.partialorder %v58, 0.0
    %v64 = vand.u32 %v58, 2147483648
    %v65 = vsel %vm63, %v64, %v62
    %v66 = vmul.f32 %v44, %v45
    %67 = vadd.xlane.f32.xlu0 %v66
    %v68 = vpop.xlane.xlu0 %67
    %v69 = vsub.f32 %v55, %v65
    %v70 = vand.u32 2147483647, %v69
    %vm71 = vcmask 7168
    %v72 = vsel %vm71, %v70, 0.0
    %73 = vadd.xlane.f32.xlu0 %v72
    %v74 = vpop.xlane.xlu0 %73
    %v75 = vrot.slane %v74, 4
    %v76 = vadd.f32 %v74, %v75
    %v77 = vrot.slane %v76, 2
    %v78 = vadd.f32 %v76, %v77
    %v79 = vrot.slane %v78, 1
    %v80 = vadd.f32 %v78, %v79
    %s81 = vtos %v80
    %v82 = vmax.f32 %v55, 1e-08
    %v83 = vmax.f32 %v65, 1e-08
    %v84 = vmul.f32 %v82, %v83
    %v85 = vrcp.pop %v84
    %v86 = vmul.f32 %v68, %v85
    %v87 = vsel %vm71, %v86, 0.0
    %88 = vadd.xlane.f32.xlu0 %v87
    %v89 = vpop.xlane.xlu0 %88
    %v90 = vrot.slane %v89, 4
    %v91 = vadd.f32 %v89, %v90
    %v92 = vrot.slane %v91, 2
    %v93 = vadd.f32 %v91, %v92
    %v94 = vrot.slane %v93, 1
    %v95 = vadd.f32 %v93, %v94
    %s96 = vtos %v95
    %v97 = vlaneseq
    %v98 = vand.u32 %v97, 127
    %vm99 = vcmp.eq.s32.totalorder %v98, 0
    %vm100 = vcmp.eq.s32.totalorder %v98, 1
    %v101 = vstv %s96
    %v102 = vsel %vm100, %v101, 0.0
    %v103 = vstv %s81
    %v104 = vsel %vm99, %v103, %v102
    %p105 = scmp.eq.s32.totalorder 0, 0
    // Predicated region
    $region18: #{tpu_custom_call.1} parent=1 // pred_check
      %p106 = pneg %p105
    $region19: #{tpu_custom_call.1} parent=1 // pred_check_branch
      %108 = sbr.rel (%p106) target = $region21
    $region20: #{tpu_custom_call.1} parent=1 // pred_region
      %109 = vst [vmem:[#allocation7] sm:$0xff] 0.0
    $region21: #{tpu_custom_call.1} parent=1 // pred_fallthru
      _
    %v110 = vld [vmem:[#allocation7] sm:$0xff]
    %v111 = vadd.f32 %v110, %v104
    %112 = vst [vmem:[#allocation7] sm:$0xff] %v111
    // Predicated region
    $region22: #{tpu_custom_call.1} parent=1 // pred_check
      _
    $region23: #{tpu_custom_call.1} parent=1 // pred_check_branch
      %114 = sbr.rel (0) target = $region25
    $region24: #{tpu_custom_call.1} parent=1 // pred_region
      %s116 = ssub.s32 128, 128
      %117 = vsyncadd [#allocation4], %s116
      %s119 = sshll.u32 [#allocation7], 4
      %s120 = int_to_ptr.vmem [resolvable:$true] %s119
      %122 = dma.vmem_to_hbm [thread:$0]  %s120, 128, %s2, [#allocation4]
    $region25: #{tpu_custom_call.1} parent=1 // pred_fallthru
      _
    // Predicated region
    $region26: #{tpu_custom_call.1} parent=1 // pred_check
      _
    $region27: #{tpu_custom_call.1} parent=1 // pred_check_branch
      %124 = sbr.rel (0) target = $region29
    $region28: #{tpu_custom_call.1} parent=1 // pred_region
      %125 = dma.done [#allocation4], 128
    $region29: #{tpu_custom_call.1} parent=1 // pred_fallthru
      _
    %126 = vsyncpa [#allocation3], 1
    %127 = vsyncpa [#allocation6], 1
    %128 = vsyncpa [#allocation4], 1

</llo_original>
